<compile_context>
chip_gen: v6e
topology: v6e:2x2x1
jax: 0.10.0
libtpu: 0.0.40
codegen_flags: <defaults>
</compile_context>

<pallas_src>
import jax
import jax.numpy as jnp
from jax.experimental import pallas as pl
from jax.experimental.pallas import tpu as pltpu


_LANE_TILE = 256      # multiple of 128 (vreg lanes) and of 256 (v6e/v7x MXU N)
_MAX_LANE_TILE = 2048


# ------------------------- fused Pallas kernel -------------------------

def _make_fused_kernel(structure):
    """Build the fused forward kernel.

    structure: list of ("block", has_shortcut) or ("final", None) entries.
    Kernel ref order: x_ref, *weight_refs, o_ref.  All activations are in the
    transposed [features, batch_tile] layout.
    """

    def kernel(*refs):
        x_ref = refs[0]
        o_ref = refs[-1]
        w_refs = refs[1:-1]
        idx = 0
        x = x_ref[...]                                     # [in_f, tile_b]
        for kind, has_shortcut in structure:
            if kind == "block":
                if has_shortcut:
                    # [W1; Ws] fused along the output (sublane) axis -> one MXU push.
                    w1ws, b1bs, w2, b2 = w_refs[idx:idx + 4]
                    idx += 4
                    mid = w2.shape[0]
                    hs = (jnp.dot(w1ws[...], x,
                                  preferred_element_type=jnp.float32)
                          + b1bs[...])                     # [2*mid, tile_b]
                    h = jnp.tanh(hs[:mid, :])              # sublane-aligned split
                    s = hs[mid:, :]
                else:
                    w1, b1, w2, b2 = w_refs[idx:idx + 4]
                    idx += 4
                    h = jnp.tanh(jnp.dot(w1[...], x,
                                         preferred_element_type=jnp.float32)
                                 + b1[...])
                    s = x
                h = jnp.tanh(jnp.dot(w2[...], h,
                                     preferred_element_type=jnp.float32)
                             + b2[...])
                # block residual add + ResNet-level activation after each block.
                x = jnp.tanh(h + s)
            else:  # final Linear (no activation)
                w, b = w_refs[idx:idx + 2]
                idx += 2
                x = jnp.dot(w[...], x,
                            preferred_element_type=jnp.float32) + b[...]
        o_ref[...] = x.astype(o_ref.dtype)                 # [out_f, tile_b] lane-dense

    return kernel


# ------------------------- tiling choice -------------------------

def _choose_tiling(batch):
    """Return (padded_batch, lane_tile): batch padded to the lane tile."""
    bp = pl.cdiv(batch, _LANE_TILE) * _LANE_TILE
    if bp <= _LANE_TILE:
        return bp, bp                       # single step, 256 lanes
    # >= 2 grid steps when possible so v7x megacore shards across both TCs.
    tile = max(_LANE_TILE,
               min(_MAX_LANE_TILE, (bp // 2) // _LANE_TILE * _LANE_TILE))
    bp = pl.cdiv(bp, tile) * tile
    return bp, tile


# ------------------------- fused pallas_call wrapper -------------------------

def resnet_forward_fused(x, params):
    batch, in_f = x.shape
    x = x.astype(jnp.float32)
    bp, tile_b = _choose_tiling(batch)

    # Features on sublanes, batch on lanes; pad batch to the tile.  Padded
    # columns compute independent garbage and are sliced off at the end.
    xt = jnp.pad(x.T, ((0, 0), (0, bp - batch)))

    structure = []
    args = [xt]
    flops = 0
    transcendentals = 0
    out_f = None

    for kind, p, has_shortcut in params:
        if kind == "block":
            mid, hin = p["w1"].shape
            if has_shortcut:
                # Pre-fused at init time (hoisted out of the forward).
                args += [p["w1ws"], p["b1bs"], p["w2"], p["b2"]]
                flops += 2 * bp * hin * (2 * mid) + 2 * bp * mid * mid
            else:
                args += [p["w1"], p["b1"], p["w2"], p["b2"]]
                flops += 2 * bp * hin * mid + 2 * bp * mid * mid
            transcendentals += 3 * bp * mid
            structure.append(("block", has_shortcut))
        else:
            out_f, kin = p["w"].shape
            args += [p["w"], p["b"]]
            flops += 2 * bp * kin * out_f
            structure.append(("final", None))

    weight_bytes = sum(int(a.size) * a.dtype.itemsize for a in args[1:])
    bytes_accessed = weight_bytes + (in_f + out_f) * bp * 4

    grid = (bp // tile_b,)

    in_specs = [pl.BlockSpec((in_f, tile_b), lambda i: (0, i))]
    # Weights/biases: full-array blocks, constant block index -> DMA'd once and
    # resident in VMEM across the whole batch grid (no re-DMA per tile).
    for a in args[1:]:
        in_specs.append(pl.BlockSpec(a.shape, lambda i: (0, 0)))
    out_specs = pl.BlockSpec((out_f, tile_b), lambda i: (0, i))

    # Explicit VMEM budget: resident weights (x2 buffering), double-buffered
    # x/out tiles, headroom for intermediates; floor well under any chip's VMEM.
    max_width = max(max(a.shape[0] for a in args[1:]), in_f, out_f)
    io_tile_bytes = (in_f + out_f) * tile_b * 4
    act_bytes = max_width * tile_b * 4
    vmem_limit = 2 * weight_bytes + 2 * io_tile_bytes + 8 * act_bytes + (2 << 20)
    vmem_limit = int(min(max(vmem_limit, 16 << 20), 100 << 20))

    out_t = pl.pallas_call(
        _make_fused_kernel(structure),
        out_shape=jax.ShapeDtypeStruct((out_f, bp), jnp.float32),
        grid=grid,
        in_specs=in_specs,
        out_specs=out_specs,
        compiler_params=pltpu.CompilerParams(
            dimension_semantics=("parallel",),
            vmem_limit_bytes=vmem_limit),
        cost_estimate=pl.CostEstimate(flops=flops,
                                      transcendentals=transcendentals,
                                      bytes_accessed=bytes_accessed),
    )(*args)

    return out_t[:, :batch].T


# ------------------------- parameter init (deterministic) -------------------------

def init_linear(key, in_f, out_f):
    # Mimics torch.nn.Linear default init: U(-1/sqrt(in_f), 1/sqrt(in_f)).
    kw, kb = jax.random.split(key)
    bound = 1.0 / jnp.sqrt(jnp.float32(in_f))
    # PyTorch orientation [out_f, in_f]; bias stored as an [out_f, 1] column.
    w = jax.random.uniform(kw, (out_f, in_f), jnp.float32, -bound, bound)
    b = jax.random.uniform(kb, (out_f, 1), jnp.float32, -bound, bound)
    return w, b


def init_resnet(key, layers_list):
    params = []
    hidden_in = layers_list[0]
    for hidden in layers_list[1:-1]:
        key, k1, k2, ks = jax.random.split(key, 4)
        w1, b1 = init_linear(k1, hidden_in, hidden)
        w2, b2 = init_linear(k2, hidden, hidden)
        block = {"w1": w1, "b1": b1, "w2": w2, "b2": b2}
        has_shortcut = hidden_in != hidden
        if has_shortcut:
            ws, bs = init_linear(ks, hidden_in, hidden)
            block["ws"] = ws
            block["bs"] = bs
            # One-time parameter prep (hoisted concat): first Linear and the
            # shortcut Linear share a single fused matmul inside the kernel.
            block["w1ws"] = jnp.concatenate([w1, ws], axis=0)   # [2*mid, in]
            block["b1bs"] = jnp.concatenate([b1, bs], axis=0)   # [2*mid, 1]
        params.append(("block", block, has_shortcut))
        hidden_in = hidden
    key, kf = jax.random.split(key)
    wf, bf = init_linear(kf, hidden_in, layers_list[-1])
    params.append(("final", {"w": wf, "b": bf}, None))
    return params


# ------------------------- pure-JAX reference -------------------------

def resnet_reference(x, params):
    for kind, p, has_shortcut in params:
        if kind == "block":
            h = jnp.tanh(x @ p["w1"].T + p["b1"].T)
            h = jnp.tanh(h @ p["w2"].T + p["b2"].T)
            s = (x @ p["ws"].T + p["bs"].T) if has_shortcut else x
            x = jnp.tanh(h + s)
        else:
            x = x @ p["w"].T + p["b"].T
    return x


# ------------------------- main -------------------------

if __name__ == "__main__":
    key = jax.random.PRNGKey(0)
    # ResNet(layers_list=[16, 32, 32, 8], activation='Tanh')
    layers_list = [16, 32, 32, 8]
    batch = 8

    kx, kp = jax.random.split(key)
    x = jax.random.normal(kx, (batch, layers_list[0]), jnp.float32)
    params = init_resnet(kp, layers_list)

    out = jax.block_until_ready(resnet_forward_fused(x, params))
    ref = resnet_reference(x, params)

    assert out.shape == (batch, layers_list[-1])
    assert jnp.allclose(out, ref, atol=1e-5, rtol=1e-5), \
        "Pallas output mismatch vs reference"

    print("KERNEL_OK")
</pallas_src>

<mosaic_0001>
module attributes {stable_mosaic.version = 11 : i64} {
  func.func @kernel(%arg0: i32, %arg1: memref<16x256xf32, #tpu.memory_space<vmem>>, %arg2: memref<64x16xf32, #tpu.memory_space<vmem>>, %arg3: memref<64x1xf32, #tpu.memory_space<vmem>>, %arg4: memref<32x32xf32, #tpu.memory_space<vmem>>, %arg5: memref<32x1xf32, #tpu.memory_space<vmem>>, %arg6: memref<32x32xf32, #tpu.memory_space<vmem>>, %arg7: memref<32x1xf32, #tpu.memory_space<vmem>>, %arg8: memref<32x32xf32, #tpu.memory_space<vmem>>, %arg9: memref<32x1xf32, #tpu.memory_space<vmem>>, %arg10: memref<8x32xf32, #tpu.memory_space<vmem>>, %arg11: memref<8x1xf32, #tpu.memory_space<vmem>>, %arg12: memref<8x256xf32, #tpu.memory_space<vmem>>) attributes {dimension_semantics = [#tpu.dimension_semantics<parallel>], iteration_bounds = array<i64: 1>, scalar_prefetch = 0 : i64, scratch_operands = 0 : i64, tpu.core_type = #tpu.core_type<tc>, window_params = [{transform_indices = @transform_0, window_bounds = array<i64: 16, 256>}, {pipeline_mode = #tpu.pipeline_mode<synchronous>, transform_indices = @transform_1, window_bounds = array<i64: 64, 16>}, {pipeline_mode = #tpu.pipeline_mode<synchronous>, transform_indices = @transform_2, window_bounds = array<i64: 64, 1>}, {pipeline_mode = #tpu.pipeline_mode<synchronous>, transform_indices = @transform_3, window_bounds = array<i64: 32, 32>}, {pipeline_mode = #tpu.pipeline_mode<synchronous>, transform_indices = @transform_4, window_bounds = array<i64: 32, 1>}, {pipeline_mode = #tpu.pipeline_mode<synchronous>, transform_indices = @transform_5, window_bounds = array<i64: 32, 32>}, {pipeline_mode = #tpu.pipeline_mode<synchronous>, transform_indices = @transform_6, window_bounds = array<i64: 32, 1>}, {pipeline_mode = #tpu.pipeline_mode<synchronous>, transform_indices = @transform_7, window_bounds = array<i64: 32, 32>}, {pipeline_mode = #tpu.pipeline_mode<synchronous>, transform_indices = @transform_8, window_bounds = array<i64: 32, 1>}, {pipeline_mode = #tpu.pipeline_mode<synchronous>, transform_indices = @transform_9, window_bounds = array<i64: 8, 32>}, {pipeline_mode = #tpu.pipeline_mode<synchronous>, transform_indices = @transform_10, window_bounds = array<i64: 8, 1>}, {transform_indices = @transform_11, window_bounds = array<i64: 8, 256>}]} {
    %c0 = arith.constant 0 : index
    %c0_0 = arith.constant 0 : index
    %0 = vector.load %arg1[%c0, %c0_0] : memref<16x256xf32, #tpu.memory_space<vmem>>, vector<16x256xf32>
    %c0_1 = arith.constant 0 : index
    %c0_2 = arith.constant 0 : index
    %1 = vector.load %arg2[%c0_1, %c0_2] : memref<64x16xf32, #tpu.memory_space<vmem>>, vector<64x16xf32>
    %cst = arith.constant dense<0.000000e+00> : vector<64x256xf32>
    %2 = tpu.matmul %1, %0, %cst {dimension_numbers = #tpu.dot_dimension_numbers<[1], [0], [0], [1], [0, 0, 1, 1], [], []>} : vector<64x16xf32>, vector<16x256xf32>, vector<64x256xf32> -> vector<64x256xf32>
    %c0_3 = arith.constant 0 : index
    %c0_4 = arith.constant 0 : index
    %3 = vector.load %arg3[%c0_3, %c0_4] : memref<64x1xf32, #tpu.memory_space<vmem>>, vector<64x1xf32>
    %4 = vector.broadcast %3 : vector<64x1xf32> to vector<64x256xf32>
    %5 = arith.addf %2, %4 : vector<64x256xf32>
    %6 = vector.extract_strided_slice %5 {offsets = [0, 0], sizes = [32, 256], strides = [1, 1]} : vector<64x256xf32> to vector<32x256xf32>
    %7 = math.tanh %6 : vector<32x256xf32>
    %8 = vector.extract_strided_slice %5 {offsets = [32, 0], sizes = [32, 256], strides = [1, 1]} : vector<64x256xf32> to vector<32x256xf32>
    %c0_5 = arith.constant 0 : index
    %c0_6 = arith.constant 0 : index
    %9 = vector.load %arg4[%c0_5, %c0_6] : memref<32x32xf32, #tpu.memory_space<vmem>>, vector<32x32xf32>
    %cst_7 = arith.constant dense<0.000000e+00> : vector<32x256xf32>
    %10 = tpu.matmul %9, %7, %cst_7 {dimension_numbers = #tpu.dot_dimension_numbers<[1], [0], [0], [1], [0, 0, 1, 1], [], []>} : vector<32x32xf32>, vector<32x256xf32>, vector<32x256xf32> -> vector<32x256xf32>
    %c0_8 = arith.constant 0 : index
    %c0_9 = arith.constant 0 : index
    %11 = vector.load %arg5[%c0_8, %c0_9] : memref<32x1xf32, #tpu.memory_space<vmem>>, vector<32x1xf32>
    %12 = vector.broadcast %11 : vector<32x1xf32> to vector<32x256xf32>
    %13 = arith.addf %10, %12 : vector<32x256xf32>
    %14 = math.tanh %13 : vector<32x256xf32>
    %15 = arith.addf %14, %8 : vector<32x256xf32>
    %16 = math.tanh %15 : vector<32x256xf32>
    %c0_10 = arith.constant 0 : index
    %c0_11 = arith.constant 0 : index
    %17 = vector.load %arg6[%c0_10, %c0_11] : memref<32x32xf32, #tpu.memory_space<vmem>>, vector<32x32xf32>
    %cst_12 = arith.constant dense<0.000000e+00> : vector<32x256xf32>
    %18 = tpu.matmul %17, %16, %cst_12 {dimension_numbers = #tpu.dot_dimension_numbers<[1], [0], [0], [1], [0, 0, 1, 1], [], []>} : vector<32x32xf32>, vector<32x256xf32>, vector<32x256xf32> -> vector<32x256xf32>
    %c0_13 = arith.constant 0 : index
    %c0_14 = arith.constant 0 : index
    %19 = vector.load %arg7[%c0_13, %c0_14] : memref<32x1xf32, #tpu.memory_space<vmem>>, vector<32x1xf32>
    %20 = vector.broadcast %19 : vector<32x1xf32> to vector<32x256xf32>
    %21 = arith.addf %18, %20 : vector<32x256xf32>
    %22 = math.tanh %21 : vector<32x256xf32>
    %c0_15 = arith.constant 0 : index
    %c0_16 = arith.constant 0 : index
    %23 = vector.load %arg8[%c0_15, %c0_16] : memref<32x32xf32, #tpu.memory_space<vmem>>, vector<32x32xf32>
    %cst_17 = arith.constant dense<0.000000e+00> : vector<32x256xf32>
    %24 = tpu.matmul %23, %22, %cst_17 {dimension_numbers = #tpu.dot_dimension_numbers<[1], [0], [0], [1], [0, 0, 1, 1], [], []>} : vector<32x32xf32>, vector<32x256xf32>, vector<32x256xf32> -> vector<32x256xf32>
    %c0_18 = arith.constant 0 : index
    %c0_19 = arith.constant 0 : index
    %25 = vector.load %arg9[%c0_18, %c0_19] : memref<32x1xf32, #tpu.memory_space<vmem>>, vector<32x1xf32>
    %26 = vector.broadcast %25 : vector<32x1xf32> to vector<32x256xf32>
    %27 = arith.addf %24, %26 : vector<32x256xf32>
    %28 = math.tanh %27 : vector<32x256xf32>
    %29 = arith.addf %28, %16 : vector<32x256xf32>
    %30 = math.tanh %29 : vector<32x256xf32>
    %c0_20 = arith.constant 0 : index
    %c0_21 = arith.constant 0 : index
    %31 = vector.load %arg10[%c0_20, %c0_21] : memref<8x32xf32, #tpu.memory_space<vmem>>, vector<8x32xf32>
    %cst_22 = arith.constant dense<0.000000e+00> : vector<8x256xf32>
    %32 = tpu.matmul %31, %30, %cst_22 {dimension_numbers = #tpu.dot_dimension_numbers<[1], [0], [0], [1], [0, 0, 1, 1], [], []>} : vector<8x32xf32>, vector<32x256xf32>, vector<8x256xf32> -> vector<8x256xf32>
    %c0_23 = arith.constant 0 : index
    %c0_24 = arith.constant 0 : index
    %33 = vector.load %arg11[%c0_23, %c0_24] : memref<8x1xf32, #tpu.memory_space<vmem>>, vector<8x1xf32>
    %34 = vector.broadcast %33 : vector<8x1xf32> to vector<8x256xf32>
    %35 = arith.addf %32, %34 : vector<8x256xf32>
    %c0_25 = arith.constant 0 : index
    %c0_26 = arith.constant 0 : index
    %36 = vector.load %arg12[%c0_25, %c0_26] : memref<8x256xf32, #tpu.memory_space<vmem>>, vector<8x256xf32>
    tpu.vector_store %arg12[%c0_25, %c0_26], %35 {strides = array<i32>} : memref<8x256xf32, #tpu.memory_space<vmem>>, vector<8x256xf32>,
    return
  }
  func.func @transform_0(%arg0: i32) -> (i32, i32) {
    %c0_i32 = arith.constant 0 : i32
    %c0_i32_0 = arith.constant 0 : i32
    return %c0_i32, %arg0 : i32, i32
  }
  func.func @transform_1(%arg0: i32) -> (i32, i32) {
    %c0_i32 = arith.constant 0 : i32
    %c0_i32_0 = arith.constant 0 : i32
    %c0_i32_1 = arith.constant 0 : i32
    return %c0_i32, %c0_i32_0 : i32, i32
  }
  func.func @transform_2(%arg0: i32) -> (i32, i32) {
    %c0_i32 = arith.constant 0 : i32
    %c0_i32_0 = arith.constant 0 : i32
    %c0_i32_1 = arith.constant 0 : i32
    return %c0_i32, %c0_i32_0 : i32, i32
  }
  func.func @transform_3(%arg0: i32) -> (i32, i32) {
    %c0_i32 = arith.constant 0 : i32
    %c0_i32_0 = arith.constant 0 : i32
    %c0_i32_1 = arith.constant 0 : i32
    return %c0_i32, %c0_i32_0 : i32, i32
  }
  func.func @transform_4(%arg0: i32) -> (i32, i32) {
    %c0_i32 = arith.constant 0 : i32
    %c0_i32_0 = arith.constant 0 : i32
    %c0_i32_1 = arith.constant 0 : i32
    return %c0_i32, %c0_i32_0 : i32, i32
  }
  func.func @transform_5(%arg0: i32) -> (i32, i32) {
    %c0_i32 = arith.constant 0 : i32
    %c0_i32_0 = arith.constant 0 : i32
    %c0_i32_1 = arith.constant 0 : i32
    return %c0_i32, %c0_i32_0 : i32, i32
  }
  func.func @transform_6(%arg0: i32) -> (i32, i32) {
    %c0_i32 = arith.constant 0 : i32
    %c0_i32_0 = arith.constant 0 : i32
    %c0_i32_1 = arith.constant 0 : i32
    return %c0_i32, %c0_i32_0 : i32, i32
  }
  func.func @transform_7(%arg0: i32) -> (i32, i32) {
    %c0_i32 = arith.constant 0 : i32
    %c0_i32_0 = arith.constant 0 : i32
    %c0_i32_1 = arith.constant 0 : i32
    return %c0_i32, %c0_i32_0 : i32, i32
  }
  func.func @transform_8(%arg0: i32) -> (i32, i32) {
    %c0_i32 = arith.constant 0 : i32
    %c0_i32_0 = arith.constant 0 : i32
    %c0_i32_1 = arith.constant 0 : i32
    return %c0_i32, %c0_i32_0 : i32, i32
  }
  func.func @transform_9(%arg0: i32) -> (i32, i32) {
    %c0_i32 = arith.constant 0 : i32
    %c0_i32_0 = arith.constant 0 : i32
    %c0_i32_1 = arith.constant 0 : i32
    return %c0_i32, %c0_i32_0 : i32, i32
  }
  func.func @transform_10(%arg0: i32) -> (i32, i32) {
    %c0_i32 = arith.constant 0 : i32
    %c0_i32_0 = arith.constant 0 : i32
    %c0_i32_1 = arith.constant 0 : i32
    return %c0_i32, %c0_i32_0 : i32, i32
  }
  func.func @transform_11(%arg0: i32) -> (i32, i32) {
    %c0_i32 = arith.constant 0 : i32
    %c0_i32_0 = arith.constant 0 : i32
    return %c0_i32, %arg0 : i32, i32
  }
}

</mosaic_0001>

<llo_original>
// kernel: tpu_custom_call.1
$region0: #{tpu_custom_call.1}
  #allocation0 [shape = 'u32[]', space=smem, size = 0x4, offset = 0x4, fixed_abs, tag = 'smem constant byte address 0x4 - core index']
  #allocation1 [shape = 'u32[144,128]{1,0:T(1,128)}', space=vmem, size = 0x12000, scoped, tag = 'internal scratch']
  %s0 = inlined_call_operand.vmem [shape: f32[16,256], index: 0, kind: input, shape index: {}]
  %s1 = inlined_call_operand.vmem [shape: f32[64,16], index: 1, kind: input, shape index: {}]
  %s2 = inlined_call_operand.vmem [shape: f32[64,1], index: 2, kind: input, shape index: {}]
  %s3 = inlined_call_operand.vmem [shape: f32[32,32], index: 3, kind: input, shape index: {}]
  %s4 = inlined_call_operand.vmem [shape: f32[32,1], index: 4, kind: input, shape index: {}]
  %s5 = inlined_call_operand.vmem [shape: f32[32,32], index: 5, kind: input, shape index: {}]
  %s6 = inlined_call_operand.vmem [shape: f32[32,1], index: 6, kind: input, shape index: {}]
  %s7 = inlined_call_operand.vmem [shape: f32[32,32], index: 7, kind: input, shape index: {}]
  %s8 = inlined_call_operand.vmem [shape: f32[32,1], index: 8, kind: input, shape index: {}]
  %s9 = inlined_call_operand.vmem [shape: f32[8,32], index: 9, kind: input, shape index: {}]
  %s10 = inlined_call_operand.vmem [shape: f32[8,1], index: 10, kind: input, shape index: {}]
  %s11 = inlined_call_operand.hbm [shape: f32[8,256], index: 11, kind: output, shape index: {}]
  %s12 = sld [smem:[#allocation0]]
  $region54: #{tpu_custom_call.1} parent=0
    _
  %s14 = ssub.s32 1, %s12
  %s15 = scalar_select 0, %s14, %s12
  $region1: #{tpu_custom_call.1} parent=0
    #allocation2 [shape = 'u8[8192]{0}', space=vmem, size = 0x2000, scoped, tag = 'output window, operand 0, single buffered']
    #allocation3 [shape = 's32[1]{0}', space=sflag, size = 0x4, scoped, tag = 'scoped memory for tpu_custom_call.1']
    %16 = vsyncpa [#allocation3], 0
    // Predicated region
    $region2: #{tpu_custom_call.1} parent=1 // pred_check
      _
    $region3: #{tpu_custom_call.1} parent=1 // pred_check_branch
      %18 = sbr.rel (0) target = $region5
    $region4: #{tpu_custom_call.1} parent=1 // pred_region
      _
    $region5: #{tpu_custom_call.1} parent=1 // pred_fallthru
      _
    // Predicated region
    $region6: #{tpu_custom_call.1} parent=1 // pred_check
      _
    $region7: #{tpu_custom_call.1} parent=1 // pred_check_branch
      %20 = sbr.rel (0) target = $region9
    $region8: #{tpu_custom_call.1} parent=1 // pred_region
      _
    $region9: #{tpu_custom_call.1} parent=1 // pred_fallthru
      _
    // Predicated region
    $region10: #{tpu_custom_call.1} parent=1 // pred_check
      _
    $region11: #{tpu_custom_call.1} parent=1 // pred_check_branch
      %22 = sbr.rel (0) target = $region13
    $region12: #{tpu_custom_call.1} parent=1 // pred_region
      _
    $region13: #{tpu_custom_call.1} parent=1 // pred_fallthru
      _
    // Predicated region
    $region14: #{tpu_custom_call.1} parent=1 // pred_check
      _
    $region15: #{tpu_custom_call.1} parent=1 // pred_check_branch
      %24 = sbr.rel (0) target = $region17
    $region16: #{tpu_custom_call.1} parent=1 // pred_region
      _
    $region17: #{tpu_custom_call.1} parent=1 // pred_fallthru
      _
    // Predicated region
    $region18: #{tpu_custom_call.1} parent=1 // pred_check
      _
    $region19: #{tpu_custom_call.1} parent=1 // pred_check_branch
      %26 = sbr.rel (0) target = $region21
    $region20: #{tpu_custom_call.1} parent=1 // pred_region
      _
    $region21: #{tpu_custom_call.1} parent=1 // pred_fallthru
      _
    // Predicated region
    $region22: #{tpu_custom_call.1} parent=1 // pred_check
      _
    $region23: #{tpu_custom_call.1} parent=1 // pred_check_branch
      %28 = sbr.rel (0) target = $region25
    $region24: #{tpu_custom_call.1} parent=1 // pred_region
      _
    $region25: #{tpu_custom_call.1} parent=1 // pred_fallthru
      _
    // Predicated region
    $region26: #{tpu_custom_call.1} parent=1 // pred_check
      _
    $region27: #{tpu_custom_call.1} parent=1 // pred_check_branch
      %30 = sbr.rel (0) target = $region29
    $region28: #{tpu_custom_call.1} parent=1 // pred_region
      _
    $region29: #{tpu_custom_call.1} parent=1 // pred_fallthru
      _
    // Predicated region
    $region30: #{tpu_custom_call.1} parent=1 // pred_check
      _
    $region31: #{tpu_custom_call.1} parent=1 // pred_check_branch
      %32 = sbr.rel (0) target = $region33
    $region32: #{tpu_custom_call.1} parent=1 // pred_region
      _
    $region33: #{tpu_custom_call.1} parent=1 // pred_fallthru
      _
    // Predicated region
    $region34: #{tpu_custom_call.1} parent=1 // pred_check
      _
    $region35: #{tpu_custom_call.1} parent=1 // pred_check_branch
      %34 = sbr.rel (0) target = $region37
    $region36: #{tpu_custom_call.1} parent=1 // pred_region
      _
    $region37: #{tpu_custom_call.1} parent=1 // pred_fallthru
      _
    // Predicated region
    $region38: #{tpu_custom_call.1} parent=1 // pred_check
      _
    $region39: #{tpu_custom_call.1} parent=1 // pred_check_branch
      %36 = sbr.rel (0) target = $region41
    $region40: #{tpu_custom_call.1} parent=1 // pred_region
      _
    $region41: #{tpu_custom_call.1} parent=1 // pred_fallthru
      _
    // Predicated region
    $region42: #{tpu_custom_call.1} parent=1 // pred_check
      _
    $region43: #{tpu_custom_call.1} parent=1 // pred_check_branch
      %38 = sbr.rel (0) target = $region45
    $region44: #{tpu_custom_call.1} parent=1 // pred_region
      _
    $region45: #{tpu_custom_call.1} parent=1 // pred_fallthru
      _
    %v39 = vld [vmem:[%s0] sm:$0xff]
    %v40 = vld [vmem:[%s0 + $0x8] sm:$0xff]
    %v41 = vld [vmem:[%s0 + $0x10] sm:$0xff]
    %v42 = vld [vmem:[%s0 + $0x18] sm:$0xff]
    %v43 = vld [vmem:[%s1] sm:$0xff]
    %v44 = vld [vmem:[%s1 + $0x8] sm:$0xff]
    %v45 = vld [vmem:[%s1 + $0x10] sm:$0xff]
    %v46 = vld [vmem:[%s1 + $0x18] sm:$0xff]
    %v47 = vld [vmem:[%s1 + $0x20] sm:$0xff]
    %v48 = vld [vmem:[%s1 + $0x28] sm:$0xff]
    %v49 = vld [vmem:[%s1 + $0x30] sm:$0xff]
    %v50 = vld [vmem:[%s1 + $0x38] sm:$0xff]
    %v51 = vld [vmem:[%s2] sm:$0xff]
    %v52 = vld [vmem:[%s2 + $0x8] sm:$0xff]
    %v53 = vld [vmem:[%s2 + $0x10] sm:$0xff]
    %v54 = vld [vmem:[%s2 + $0x18] sm:$0xff]
    %v55 = vld [vmem:[%s2 + $0x20] sm:$0xff]
    %v56 = vld [vmem:[%s2 + $0x28] sm:$0xff]
    %v57 = vld [vmem:[%s2 + $0x30] sm:$0xff]
    %v58 = vld [vmem:[%s2 + $0x38] sm:$0xff]
    %60 = vset.pattern.permute.xlu0 0
    %61 = vperm.xlu0 %60, %v51
    %v62 = vpop.permute.xlu0 %61
    %65 = vset.pattern.permute.xlu0 0
    %66 = vperm.xlu0 %65, %v52
    %v67 = vpop.permute.xlu0 %66
    %70 = vset.pattern.permute.xlu0 0
    %71 = vperm.xlu0 %70, %v53
    %v72 = vpop.permute.xlu0 %71
    %75 = vset.pattern.permute.xlu0 0
    %76 = vperm.xlu0 %75, %v54
    %v77 = vpop.permute.xlu0 %76
    %80 = vset.pattern.permute.xlu0 0
    %81 = vperm.xlu0 %80, %v55
    %v82 = vpop.permute.xlu0 %81
    %85 = vset.pattern.permute.xlu0 0
    %86 = vperm.xlu0 %85, %v56
    %v87 = vpop.permute.xlu0 %86
    %90 = vset.pattern.permute.xlu0 0
    %91 = vperm.xlu0 %90, %v57
    %v92 = vpop.permute.xlu0 %91
    %95 = vset.pattern.permute.xlu0 0
    %96 = vperm.xlu0 %95, %v58
    %v97 = vpop.permute.xlu0 %96
    %vm99 = vcmask 130048
    %v101 = vsel %vm99, %v43, 0
    %v104 = vsel %vm99, %v44, 0
    %v107 = vsel %vm99, %v45, 0
    %v110 = vsel %vm99, %v46, 0
    %v113 = vsel %vm99, %v47, 0
    %v116 = vsel %vm99, %v48, 0
    %v119 = vsel %vm99, %v49, 0
    %v122 = vsel %vm99, %v50, 0
    %124 = vmatprep.subr.mxu0 0.0
    %125 = vmatpush1.msra.mxu0 0.0
    %126 = vmatprep.subr.mxu0 0.0
    %127 = vmatpush1.msra.mxu0 0.0
    %128 = vmatprep.subr.mxu0 0.0
    %129 = vmatpush1.msra.mxu0 0.0
    %130 = vmatprep.subr.mxu0 0.0
    %131 = vmatpush1.msra.mxu0 0.0
    %132 = vmatprep.subr.mxu0 0.0
    %133 = vmatpush1.msra.mxu0 0.0
    %134 = vmatprep.subr.mxu0 0.0
    %135 = vmatpush1.msra.mxu0 0.0
    %136 = vmatprep.subr.mxu0 0.0
    %137 = vmatpush1.msra.mxu0 0.0
    %138 = vmatprep.subr.mxu0 0.0
    %139 = vmatpush1.msra.mxu0 0.0
    %140 = vmatprep.subr.mxu0 0.0
    %141 = vmatpush1.msra.mxu0 0.0
    %142 = vmatprep.subr.mxu0 0.0
    %143 = vmatpush1.msra.mxu0 0.0
    %144 = vmatprep.subr.mxu0 0.0
    %145 = vmatpush1.msra.mxu0 0.0
    %146 = vmatprep.subr.mxu0 0.0
    %147 = vmatpush1.msra.mxu0 0.0
    %148 = vmatprep.subr.mxu0 0.0
    %149 = vmatpush1.msra.mxu0 0.0
    %150 = vmatprep.subr.mxu0 0.0
    %151 = vmatpush1.msra.mxu0 0.0
    %152 = vmatprep.subr.mxu0 %v42
    %153 = vmatpush1.msra.mxu0 %v41
    %154 = vmatprep.subr.mxu0 %v40
    %155 = vmatpush1.msra.mxu0 %v39
    %156 = vmatprep.subr.mxu0 0.0
    %157 = vmatpush2.msra.mxu0 0.0
    %158 = vmatprep.subr.mxu0 0.0
    %159 = vmatpush2.msra.mxu0 0.0
    %160 = vmatprep.subr.mxu0 0.0
    %161 = vmatpush2.msra.mxu0 0.0
    %162 = vmatprep.subr.mxu0 0.0
    %163 = vmatpush2.msra.mxu0 0.0
    %164 = vmatprep.subr.mxu0 0.0
    %165 = vmatpush2.msra.mxu0 0.0
    %166 = vmatprep.subr.mxu0 0.0
    %167 = vmatpush2.msra.mxu0 0.0
    %168 = vmatprep.subr.mxu0 0.0
    %169 = vmatpush2.msra.mxu0 0.0
    %170 = vmatprep.subr.mxu0 0.0
    %171 = vmatpush2.msra.mxu0 0.0
    %172 = vmatprep.subr.mxu0 0.0
    %173 = vmatpush2.msra.mxu0 0.0
    %174 = vmatprep.subr.mxu0 0.0
    %175 = vmatpush2.msra.mxu0 0.0
    %176 = vmatprep.subr.mxu0 0.0
    %177 = vmatpush2.msra.mxu0 0.0
    %178 = vmatprep.subr.mxu0 0.0
    %179 = vmatpush2.msra.mxu0 0.0
    %180 = vmatprep.subr.mxu0 0.0
    %181 = vmatpush2.msra.mxu0 0.0
    %182 = vmatprep.subr.mxu0 0.0
    %183 = vmatpush2.msra.mxu0 0.0
    %184 = vmatprep.subr.mxu0 0.0
    %185 = vmatpush2.msra.mxu0 0.0
    %186 = vmatprep.subr.mxu0 0.0
    %187 = vmatpush2.msra.mxu0 0.0
    %188 = vmatprep.mubr.f32.mxu0 0.0
    %189 = vmatmul.mubr.f32.gmra.mxu0 %v101
    %v190 = vpop.f32.mrf.mxu0
    %v191 = vadd.f32 %v62, %v190
    %v192 = vpop.f32.mrf.mxu0
    %v193 = vadd.f32 %v62, %v192
    %194 = vmatprep.mubr.f32.mxu0 0.0
    %195 = vmatmul.mubr.f32.gmra.mxu0 %v104
    %v196 = vpop.f32.mrf.mxu0
    %v197 = vadd.f32 %v67, %v196
    %v198 = vpop.f32.mrf.mxu0
    %v199 = vadd.f32 %v67, %v198
    %200 = vmatprep.mubr.f32.mxu0 0.0
    %201 = vmatmul.mubr.f32.gmra.mxu0 %v107
    %v202 = vpop.f32.mrf.mxu0
    %v203 = vadd.f32 %v72, %v202
    %v204 = vpop.f32.mrf.mxu0
    %v205 = vadd.f32 %v72, %v204
    %206 = vmatprep.mubr.f32.mxu0 0.0
    %207 = vmatmul.mubr.f32.gmra.mxu0 %v110
    %v208 = vpop.f32.mrf.mxu0
    %v209 = vadd.f32 %v77, %v208
    %v210 = vpop.f32.mrf.mxu0
    %v211 = vadd.f32 %v77, %v210
    %212 = vmatprep.mubr.f32.mxu0 0.0
    %213 = vmatmul.mubr.f32.gmra.mxu0 %v113
    %v214 = vpop.f32.mrf.mxu0
    %v215 = vadd.f32 %v82, %v214
    %v216 = vpop.f32.mrf.mxu0
    %v217 = vadd.f32 %v82, %v216
    %218 = vmatprep.mubr.f32.mxu0 0.0
    %219 = vmatmul.mubr.f32.gmra.mxu0 %v116
    %v220 = vpop.f32.mrf.mxu0
    %v221 = vadd.f32 %v87, %v220
    %v222 = vpop.f32.mrf.mxu0
    %v223 = vadd.f32 %v87, %v222
    %224 = vmatprep.mubr.f32.mxu0 0.0
    %225 = vmatmul.mubr.f32.gmra.mxu0 %v119
    %v226 = vpop.f32.mrf.mxu0
    %v227 = vadd.f32 %v92, %v226
    %v228 = vpop.f32.mrf.mxu0
    %v229 = vadd.f32 %v92, %v228
    %230 = vmatprep.mubr.f32.mxu0 0.0
    %231 = vmatmul.mubr.f32.gmra.mxu0 %v122
    %v232 = vpop.f32.mrf.mxu0
    %v233 = vadd.f32 %v97, %v232
    %v234 = vpop.f32.mrf.mxu0
    %v235 = vadd.f32 %v97, %v234
    %236 = vdwg.mxu0
    %v237 = vtanh.pop %v191
    %v238 = vtanh.pop %v193
    %v239 = vtanh.pop %v197
    %v240 = vtanh.pop %v199
    %v241 = vtanh.pop %v203
    %v242 = vtanh.pop %v205
    %v243 = vtanh.pop %v209
    %v244 = vtanh.pop %v211
    %v245 = vld [vmem:[%s3] sm:$0xff]
    %v246 = vld [vmem:[%s3 + $0x8] sm:$0xff]
    %v247 = vld [vmem:[%s3 + $0x10] sm:$0xff]
    %v248 = vld [vmem:[%s3 + $0x18] sm:$0xff]
    %v249 = vld [vmem:[%s4] sm:$0xff]
    %v250 = vld [vmem:[%s4 + $0x8] sm:$0xff]
    %v251 = vld [vmem:[%s4 + $0x10] sm:$0xff]
    %v252 = vld [vmem:[%s4 + $0x18] sm:$0xff]
    %254 = vset.pattern.permute.xlu0 0
    %255 = vperm.xlu0 %254, %v249
    %v256 = vpop.permute.xlu0 %255
    %259 = vset.pattern.permute.xlu0 0
    %260 = vperm.xlu0 %259, %v250
    %v261 = vpop.permute.xlu0 %260
    %264 = vset.pattern.permute.xlu0 0
    %265 = vperm.xlu0 %264, %v251
    %v266 = vpop.permute.xlu0 %265
    %269 = vset.pattern.permute.xlu0 0
    %270 = vperm.xlu0 %269, %v252
    %v271 = vpop.permute.xlu0 %270
    %vm273 = vcmask 261120
    %v275 = vsel %vm273, %v245, 0
    %v278 = vsel %vm273, %v246, 0
    %v281 = vsel %vm273, %v247, 0
    %v284 = vsel %vm273, %v248, 0
    %286 = vmatprep.subr.mxu0 0.0
    %287 = vmatpush1.msra.mxu0 0.0
    %288 = vmatprep.subr.mxu0 0.0
    %289 = vmatpush1.msra.mxu0 0.0
    %290 = vmatprep.subr.mxu0 0.0
    %291 = vmatpush1.msra.mxu0 0.0
    %292 = vmatprep.subr.mxu0 0.0
    %293 = vmatpush1.msra.mxu0 0.0
    %294 = vmatprep.subr.mxu0 0.0
    %295 = vmatpush1.msra.mxu0 0.0
    %296 = vmatprep.subr.mxu0 0.0
    %297 = vmatpush1.msra.mxu0 0.0
    %298 = vmatprep.subr.mxu0 0.0
    %299 = vmatpush1.msra.mxu0 0.0
    %300 = vmatprep.subr.mxu0 0.0
    %301 = vmatpush1.msra.mxu0 0.0
    %302 = vmatprep.subr.mxu0 0.0
    %303 = vmatpush1.msra.mxu0 0.0
    %304 = vmatprep.subr.mxu0 0.0
    %305 = vmatpush1.msra.mxu0 0.0
    %306 = vmatprep.subr.mxu0 0.0
    %307 = vmatpush1.msra.mxu0 0.0
    %308 = vmatprep.subr.mxu0 0.0
    %309 = vmatpush1.msra.mxu0 0.0
    %310 = vmatprep.subr.mxu0 %v244
    %311 = vmatpush1.msra.mxu0 %v243
    %312 = vmatprep.subr.mxu0 %v242
    %313 = vmatpush1.msra.mxu0 %v241
    %314 = vmatprep.subr.mxu0 %v240
    %315 = vmatpush1.msra.mxu0 %v239
    %316 = vmatprep.subr.mxu0 %v238
    %317 = vmatpush1.msra.mxu0 %v237
    %318 = vmatprep.subr.mxu0 0.0
    %319 = vmatpush2.msra.mxu0 0.0
    %320 = vmatprep.subr.mxu0 0.0
    %321 = vmatpush2.msra.mxu0 0.0
    %322 = vmatprep.subr.mxu0 0.0
    %323 = vmatpush2.msra.mxu0 0.0
    %324 = vmatprep.subr.mxu0 0.0
    %325 = vmatpush2.msra.mxu0 0.0
    %326 = vmatprep.subr.mxu0 0.0
    %327 = vmatpush2.msra.mxu0 0.0
    %328 = vmatprep.subr.mxu0 0.0
    %329 = vmatpush2.msra.mxu0 0.0
    %330 = vmatprep.subr.mxu0 0.0
    %331 = vmatpush2.msra.mxu0 0.0
    %332 = vmatprep.subr.mxu0 0.0
    %333 = vmatpush2.msra.mxu0 0.0
    %334 = vmatprep.subr.mxu0 0.0
    %335 = vmatpush2.msra.mxu0 0.0
    %336 = vmatprep.subr.mxu0 0.0
    %337 = vmatpush2.msra.mxu0 0.0
    %338 = vmatprep.subr.mxu0 0.0
    %339 = vmatpush2.msra.mxu0 0.0
    %340 = vmatprep.subr.mxu0 0.0
    %341 = vmatpush2.msra.mxu0 0.0
    %342 = vmatprep.subr.mxu0 0.0
    %343 = vmatpush2.msra.mxu0 0.0
    %344 = vmatprep.subr.mxu0 0.0
    %345 = vmatpush2.msra.mxu0 0.0
    %346 = vmatprep.subr.mxu0 0.0
    %347 = vmatpush2.msra.mxu0 0.0
    %348 = vmatprep.subr.mxu0 0.0
    %349 = vmatpush2.msra.mxu0 0.0
    %350 = vmatprep.mubr.f32.mxu0 0.0
    %351 = vmatmul.mubr.f32.gmra.mxu0 %v275
    %v352 = vpop.f32.mrf.mxu0
    %v353 = vadd.f32 %v256, %v352
    %v354 = vpop.f32.mrf.mxu0
    %v355 = vadd.f32 %v256, %v354
    %356 = vmatprep.mubr.f32.mxu0 0.0
    %357 = vmatmul.mubr.f32.gmra.mxu0 %v278
    %v358 = vpop.f32.mrf.mxu0
    %v359 = vadd.f32 %v261, %v358
    %v360 = vpop.f32.mrf.mxu0
    %v361 = vadd.f32 %v261, %v360
    %362 = vmatprep.mubr.f32.mxu0 0.0
    %363 = vmatmul.mubr.f32.gmra.mxu0 %v281
    %v364 = vpop.f32.mrf.mxu0
    %v365 = vadd.f32 %v266, %v364
    %v366 = vpop.f32.mrf.mxu0
    %v367 = vadd.f32 %v266, %v366
    %368 = vmatprep.mubr.f32.mxu0 0.0
    %369 = vmatmul.mubr.f32.gmra.mxu0 %v284
    %v370 = vpop.f32.mrf.mxu0
    %v371 = vadd.f32 %v271, %v370
    %v372 = vpop.f32.mrf.mxu0
    %v373 = vadd.f32 %v271, %v372
    %374 = vdwg.mxu0
    %v375 = vtanh.pop %v353
    %v376 = vtanh.pop %v355
    %v377 = vtanh.pop %v359
    %v378 = vtanh.pop %v361
    %v379 = vtanh.pop %v365
    %v380 = vtanh.pop %v367
    %v381 = vtanh.pop %v371
    %v382 = vtanh.pop %v373
    %v383 = vadd.f32 %v375, %v215
    %v384 = vadd.f32 %v376, %v217
    %v385 = vadd.f32 %v377, %v221
    %v386 = vadd.f32 %v378, %v223
    %v387 = vadd.f32 %v379, %v227
    %v388 = vadd.f32 %v380, %v229
    %v389 = vadd.f32 %v381, %v233
    %v390 = vadd.f32 %v382, %v235
    %v391 = vtanh.pop %v383
    %v392 = vtanh.pop %v384
    %v393 = vtanh.pop %v385
    %v394 = vtanh.pop %v386
    %v395 = vtanh.pop %v387
    %v396 = vtanh.pop %v388
    %v397 = vtanh.pop %v389
    %v398 = vtanh.pop %v390
    %v399 = vld [vmem:[%s5] sm:$0xff]
    %v400 = vld [vmem:[%s5 + $0x8] sm:$0xff]
    %v401 = vld [vmem:[%s5 + $0x10] sm:$0xff]
    %v402 = vld [vmem:[%s5 + $0x18] sm:$0xff]
    %v403 = vld [vmem:[%s6] sm:$0xff]
    %v404 = vld [vmem:[%s6 + $0x8] sm:$0xff]
    %v405 = vld [vmem:[%s6 + $0x10] sm:$0xff]
    %v406 = vld [vmem:[%s6 + $0x18] sm:$0xff]
    %408 = vset.pattern.permute.xlu0 0
    %409 = vperm.xlu0 %408, %v403
    %v410 = vpop.permute.xlu0 %409
    %413 = vset.pattern.permute.xlu0 0
    %414 = vperm.xlu0 %413, %v404
    %v415 = vpop.permute.xlu0 %414
    %418 = vset.pattern.permute.xlu0 0
    %419 = vperm.xlu0 %418, %v405
    %v420 = vpop.permute.xlu0 %419
    %423 = vset.pattern.permute.xlu0 0
    %424 = vperm.xlu0 %423, %v406
    %v425 = vpop.permute.xlu0 %424
    %v428 = vsel %vm273, %v399, 0
    %v431 = vsel %vm273, %v400, 0
    %v434 = vsel %vm273, %v401, 0
    %v437 = vsel %vm273, %v402, 0
    %439 = vmatprep.subr.mxu0 0.0
    %440 = vmatpush1.msra.mxu0 0.0
    %441 = vmatprep.subr.mxu0 0.0
    %442 = vmatpush1.msra.mxu0 0.0
    %443 = vmatprep.subr.mxu0 0.0
    %444 = vmatpush1.msra.mxu0 0.0
    %445 = vmatprep.subr.mxu0 0.0
    %446 = vmatpush1.msra.mxu0 0.0
    %447 = vmatprep.subr.mxu0 0.0
    %448 = vmatpush1.msra.mxu0 0.0
    %449 = vmatprep.subr.mxu0 0.0
    %450 = vmatpush1.msra.mxu0 0.0
    %451 = vmatprep.subr.mxu0 0.0
    %452 = vmatpush1.msra.mxu0 0.0
    %453 = vmatprep.subr.mxu0 0.0
    %454 = vmatpush1.msra.mxu0 0.0
    %455 = vmatprep.subr.mxu0 0.0
    %456 = vmatpush1.msra.mxu0 0.0
    %457 = vmatprep.subr.mxu0 0.0
    %458 = vmatpush1.msra.mxu0 0.0
    %459 = vmatprep.subr.mxu0 0.0
    %460 = vmatpush1.msra.mxu0 0.0
    %461 = vmatprep.subr.mxu0 0.0
    %462 = vmatpush1.msra.mxu0 0.0
    %463 = vmatprep.subr.mxu0 %v398
    %464 = vmatpush1.msra.mxu0 %v397
    %465 = vmatprep.subr.mxu0 %v396
    %466 = vmatpush1.msra.mxu0 %v395
    %467 = vmatprep.subr.mxu0 %v394
    %468 = vmatpush1.msra.mxu0 %v393
    %469 = vmatprep.subr.mxu0 %v392
    %470 = vmatpush1.msra.mxu0 %v391
    %471 = vmatprep.subr.mxu0 0.0
    %472 = vmatpush2.msra.mxu0 0.0
    %473 = vmatprep.subr.mxu0 0.0
    %474 = vmatpush2.msra.mxu0 0.0
    %475 = vmatprep.subr.mxu0 0.0
    %476 = vmatpush2.msra.mxu0 0.0
    %477 = vmatprep.subr.mxu0 0.0
    %478 = vmatpush2.msra.mxu0 0.0
    %479 = vmatprep.subr.mxu0 0.0
    %480 = vmatpush2.msra.mxu0 0.0
    %481 = vmatprep.subr.mxu0 0.0
    %482 = vmatpush2.msra.mxu0 0.0
    %483 = vmatprep.subr.mxu0 0.0
    %484 = vmatpush2.msra.mxu0 0.0
    %485 = vmatprep.subr.mxu0 0.0
    %486 = vmatpush2.msra.mxu0 0.0
    %487 = vmatprep.subr.mxu0 0.0
    %488 = vmatpush2.msra.mxu0 0.0
    %489 = vmatprep.subr.mxu0 0.0
    %490 = vmatpush2.msra.mxu0 0.0
    %491 = vmatprep.subr.mxu0 0.0
    %492 = vmatpush2.msra.mxu0 0.0
    %493 = vmatprep.subr.mxu0 0.0
    %494 = vmatpush2.msra.mxu0 0.0
    %495 = vmatprep.subr.mxu0 0.0
    %496 = vmatpush2.msra.mxu0 0.0
    %497 = vmatprep.subr.mxu0 0.0
    %498 = vmatpush2.msra.mxu0 0.0
    %499 = vmatprep.subr.mxu0 0.0
    %500 = vmatpush2.msra.mxu0 0.0
    %501 = vmatprep.subr.mxu0 0.0
    %502 = vmatpush2.msra.mxu0 0.0
    %503 = vmatprep.mubr.f32.mxu0 0.0
    %504 = vmatmul.mubr.f32.gmra.mxu0 %v428
    %v505 = vpop.f32.mrf.mxu0
    %v506 = vadd.f32 %v410, %v505
    %v507 = vpop.f32.mrf.mxu0
    %v508 = vadd.f32 %v410, %v507
    %509 = vmatprep.mubr.f32.mxu0 0.0
    %510 = vmatmul.mubr.f32.gmra.mxu0 %v431
    %v511 = vpop.f32.mrf.mxu0
    %v512 = vadd.f32 %v415, %v511
    %v513 = vpop.f32.mrf.mxu0
    %v514 = vadd.f32 %v415, %v513
    %515 = vmatprep.mubr.f32.mxu0 0.0
    %516 = vmatmul.mubr.f32.gmra.mxu0 %v434
    %v517 = vpop.f32.mrf.mxu0
    %v518 = vadd.f32 %v420, %v517
    %v519 = vpop.f32.mrf.mxu0
    %v520 = vadd.f32 %v420, %v519
    %521 = vmatprep.mubr.f32.mxu0 0.0
    %522 = vmatmul.mubr.f32.gmra.mxu0 %v437
    %v523 = vpop.f32.mrf.mxu0
    %v524 = vadd.f32 %v425, %v523
    %v525 = vpop.f32.mrf.mxu0
    %v526 = vadd.f32 %v425, %v525
    %527 = vdwg.mxu0
    %v528 = vtanh.pop %v506
    %v529 = vtanh.pop %v508
    %v530 = vtanh.pop %v512
    %v531 = vtanh.pop %v514
    %v532 = vtanh.pop %v518
    %v533 = vtanh.pop %v520
    %v534 = vtanh.pop %v524
    %v535 = vtanh.pop %v526
    %v536 = vld [vmem:[%s7] sm:$0xff]
    %v537 = vld [vmem:[%s7 + $0x8] sm:$0xff]
    %v538 = vld [vmem:[%s7 + $0x10] sm:$0xff]
    %v539 = vld [vmem:[%s7 + $0x18] sm:$0xff]
    %v540 = vld [vmem:[%s8] sm:$0xff]
    %v541 = vld [vmem:[%s8 + $0x8] sm:$0xff]
    %v542 = vld [vmem:[%s8 + $0x10] sm:$0xff]
    %v543 = vld [vmem:[%s8 + $0x18] sm:$0xff]
    %545 = vset.pattern.permute.xlu0 0
    %546 = vperm.xlu0 %545, %v540
    %v547 = vpop.permute.xlu0 %546
    %550 = vset.pattern.permute.xlu0 0
    %551 = vperm.xlu0 %550, %v541
    %v552 = vpop.permute.xlu0 %551
    %555 = vset.pattern.permute.xlu0 0
    %556 = vperm.xlu0 %555, %v542
    %v557 = vpop.permute.xlu0 %556
    %560 = vset.pattern.permute.xlu0 0
    %561 = vperm.xlu0 %560, %v543
    %v562 = vpop.permute.xlu0 %561
    %v565 = vsel %vm273, %v536, 0
    %v568 = vsel %vm273, %v537, 0
    %v571 = vsel %vm273, %v538, 0
    %v574 = vsel %vm273, %v539, 0
    %576 = vmatprep.subr.mxu0 0.0
    %577 = vmatpush1.msra.mxu0 0.0
    %578 = vmatprep.subr.mxu0 0.0
    %579 = vmatpush1.msra.mxu0 0.0
    %580 = vmatprep.subr.mxu0 0.0
    %581 = vmatpush1.msra.mxu0 0.0
    %582 = vmatprep.subr.mxu0 0.0
    %583 = vmatpush1.msra.mxu0 0.0
    %584 = vmatprep.subr.mxu0 0.0
    %585 = vmatpush1.msra.mxu0 0.0
    %586 = vmatprep.subr.mxu0 0.0
    %587 = vmatpush1.msra.mxu0 0.0
    %588 = vmatprep.subr.mxu0 0.0
    %589 = vmatpush1.msra.mxu0 0.0
    %590 = vmatprep.subr.mxu0 0.0
    %591 = vmatpush1.msra.mxu0 0.0
    %592 = vmatprep.subr.mxu0 0.0
    %593 = vmatpush1.msra.mxu0 0.0
    %594 = vmatprep.subr.mxu0 0.0
    %595 = vmatpush1.msra.mxu0 0.0
    %596 = vmatprep.subr.mxu0 0.0
    %597 = vmatpush1.msra.mxu0 0.0
    %598 = vmatprep.subr.mxu0 0.0
    %599 = vmatpush1.msra.mxu0 0.0
    %600 = vmatprep.subr.mxu0 %v535
    %601 = vmatpush1.msra.mxu0 %v534
    %602 = vmatprep.subr.mxu0 %v533
    %603 = vmatpush1.msra.mxu0 %v532
    %604 = vmatprep.subr.mxu0 %v531
    %605 = vmatpush1.msra.mxu0 %v530
    %606 = vmatprep.subr.mxu0 %v529
    %607 = vmatpush1.msra.mxu0 %v528
    %608 = vmatprep.subr.mxu0 0.0
    %609 = vmatpush2.msra.mxu0 0.0
    %610 = vmatprep.subr.mxu0 0.0
    %611 = vmatpush2.msra.mxu0 0.0
    %612 = vmatprep.subr.mxu0 0.0
    %613 = vmatpush2.msra.mxu0 0.0
    %614 = vmatprep.subr.mxu0 0.0
    %615 = vmatpush2.msra.mxu0 0.0
    %616 = vmatprep.subr.mxu0 0.0
    %617 = vmatpush2.msra.mxu0 0.0
    %618 = vmatprep.subr.mxu0 0.0
    %619 = vmatpush2.msra.mxu0 0.0
    %620 = vmatprep.subr.mxu0 0.0
    %621 = vmatpush2.msra.mxu0 0.0
    %622 = vmatprep.subr.mxu0 0.0
    %623 = vmatpush2.msra.mxu0 0.0
    %624 = vmatprep.subr.mxu0 0.0
    %625 = vmatpush2.msra.mxu0 0.0
    %626 = vmatprep.subr.mxu0 0.0
    %627 = vmatpush2.msra.mxu0 0.0
    %628 = vmatprep.subr.mxu0 0.0
    %629 = vmatpush2.msra.mxu0 0.0
    %630 = vmatprep.subr.mxu0 0.0
    %631 = vmatpush2.msra.mxu0 0.0
    %632 = vmatprep.subr.mxu0 0.0
    %633 = vmatpush2.msra.mxu0 0.0
    %634 = vmatprep.subr.mxu0 0.0
    %635 = vmatpush2.msra.mxu0 0.0
    %636 = vmatprep.subr.mxu0 0.0
    %637 = vmatpush2.msra.mxu0 0.0
    %638 = vmatprep.subr.mxu0 0.0
    %639 = vmatpush2.msra.mxu0 0.0
    %640 = vmatprep.mubr.f32.mxu0 0.0
    %641 = vmatmul.mubr.f32.gmra.mxu0 %v565
    %v642 = vpop.f32.mrf.mxu0
    %v643 = vadd.f32 %v547, %v642
    %v644 = vpop.f32.mrf.mxu0
    %v645 = vadd.f32 %v547, %v644
    %646 = vmatprep.mubr.f32.mxu0 0.0
    %647 = vmatmul.mubr.f32.gmra.mxu0 %v568
    %v648 = vpop.f32.mrf.mxu0
    %v649 = vadd.f32 %v552, %v648
    %v650 = vpop.f32.mrf.mxu0
    %v651 = vadd.f32 %v552, %v650
    %652 = vmatprep.mubr.f32.mxu0 0.0
    %653 = vmatmul.mubr.f32.gmra.mxu0 %v571
    %v654 = vpop.f32.mrf.mxu0
    %v655 = vadd.f32 %v557, %v654
    %v656 = vpop.f32.mrf.mxu0
    %v657 = vadd.f32 %v557, %v656
    %658 = vmatprep.mubr.f32.mxu0 0.0
    %659 = vmatmul.mubr.f32.gmra.mxu0 %v574
    %v660 = vpop.f32.mrf.mxu0
    %v661 = vadd.f32 %v562, %v660
    %v662 = vpop.f32.mrf.mxu0
    %v663 = vadd.f32 %v562, %v662
    %664 = vdwg.mxu0
    %v665 = vtanh.pop %v643
    %v666 = vtanh.pop %v645
    %v667 = vtanh.pop %v649
    %v668 = vtanh.pop %v651
    %v669 = vtanh.pop %v655
    %v670 = vtanh.pop %v657
    %v671 = vtanh.pop %v661
    %v672 = vtanh.pop %v663
    %v673 = vadd.f32 %v665, %v391
    %v674 = vadd.f32 %v666, %v392
    %v675 = vadd.f32 %v667, %v393
    %v676 = vadd.f32 %v668, %v394
    %v677 = vadd.f32 %v669, %v395
    %v678 = vadd.f32 %v670, %v396
    %v679 = vadd.f32 %v671, %v397
    %v680 = vadd.f32 %v672, %v398
    %v681 = vtanh.pop %v673
    %v682 = vtanh.pop %v674
    %v683 = vtanh.pop %v675
    %v684 = vtanh.pop %v676
    %v685 = vtanh.pop %v677
    %v686 = vtanh.pop %v678
    %v687 = vtanh.pop %v679
    %v688 = vtanh.pop %v680
    %v689 = vld [vmem:[%s9] sm:$0xff]
    %v690 = vld [vmem:[%s10] sm:$0xff]
    %692 = vset.pattern.permute.xlu0 0
    %693 = vperm.xlu0 %692, %v690
    %v694 = vpop.permute.xlu0 %693
    %v697 = vsel %vm273, %v689, 0
    %699 = vmatprep.subr.mxu0 0.0
    %700 = vmatpush1.msra.mxu0 0.0
    %701 = vmatprep.subr.mxu0 0.0
    %702 = vmatpush1.msra.mxu0 0.0
    %703 = vmatprep.subr.mxu0 0.0
    %704 = vmatpush1.msra.mxu0 0.0
    %705 = vmatprep.subr.mxu0 0.0
    %706 = vmatpush1.msra.mxu0 0.0
    %707 = vmatprep.subr.mxu0 0.0
    %708 = vmatpush1.msra.mxu0 0.0
    %709 = vmatprep.subr.mxu0 0.0
    %710 = vmatpush1.msra.mxu0 0.0
    %711 = vmatprep.subr.mxu0 0.0
    %712 = vmatpush1.msra.mxu0 0.0
    %713 = vmatprep.subr.mxu0 0.0
    %714 = vmatpush1.msra.mxu0 0.0
    %715 = vmatprep.subr.mxu0 0.0
    %716 = vmatpush1.msra.mxu0 0.0
    %717 = vmatprep.subr.mxu0 0.0
    %718 = vmatpush1.msra.mxu0 0.0
    %719 = vmatprep.subr.mxu0 0.0
    %720 = vmatpush1.msra.mxu0 0.0
    %721 = vmatprep.subr.mxu0 0.0
    %722 = vmatpush1.msra.mxu0 0.0
    %723 = vmatprep.subr.mxu0 %v688
    %724 = vmatpush1.msra.mxu0 %v687
    %725 = vmatprep.subr.mxu0 %v686
    %726 = vmatpush1.msra.mxu0 %v685
    %727 = vmatprep.subr.mxu0 %v684
    %728 = vmatpush1.msra.mxu0 %v683
    %729 = vmatprep.subr.mxu0 %v682
    %730 = vmatpush1.msra.mxu0 %v681
    %731 = vmatprep.subr.mxu0 0.0
    %732 = vmatpush2.msra.mxu0 0.0
    %733 = vmatprep.subr.mxu0 0.0
    %734 = vmatpush2.msra.mxu0 0.0
    %735 = vmatprep.subr.mxu0 0.0
    %736 = vmatpush2.msra.mxu0 0.0
    %737 = vmatprep.subr.mxu0 0.0
    %738 = vmatpush2.msra.mxu0 0.0
    %739 = vmatprep.subr.mxu0 0.0
    %740 = vmatpush2.msra.mxu0 0.0
    %741 = vmatprep.subr.mxu0 0.0
    %742 = vmatpush2.msra.mxu0 0.0
    %743 = vmatprep.subr.mxu0 0.0
    %744 = vmatpush2.msra.mxu0 0.0
    %745 = vmatprep.subr.mxu0 0.0
    %746 = vmatpush2.msra.mxu0 0.0
    %747 = vmatprep.subr.mxu0 0.0
    %748 = vmatpush2.msra.mxu0 0.0
    %749 = vmatprep.subr.mxu0 0.0
    %750 = vmatpush2.msra.mxu0 0.0
    %751 = vmatprep.subr.mxu0 0.0
    %752 = vmatpush2.msra.mxu0 0.0
    %753 = vmatprep.subr.mxu0 0.0
    %754 = vmatpush2.msra.mxu0 0.0
    %755 = vmatprep.subr.mxu0 0.0
    %756 = vmatpush2.msra.mxu0 0.0
    %757 = vmatprep.subr.mxu0 0.0
    %758 = vmatpush2.msra.mxu0 0.0
    %759 = vmatprep.subr.mxu0 0.0
    %760 = vmatpush2.msra.mxu0 0.0
    %761 = vmatprep.subr.mxu0 0.0
    %762 = vmatpush2.msra.mxu0 0.0
    %763 = vmatprep.mubr.f32.mxu0 0.0
    %764 = vmatmul.mubr.f32.gmra.mxu0 %v697
    %v765 = vpop.f32.mrf.mxu0
    %v766 = vadd.f32 %v694, %v765
    %v767 = vpop.f32.mrf.mxu0
    %v768 = vadd.f32 %v694, %v767
    %769 = vdwg.mxu0
    %770 = vst [vmem:[#allocation2] sm:$0xff] %v766
    %771 = vst [vmem:[#allocation2 + $0x8] sm:$0xff] %v768
    // Predicated region
    $region46: #{tpu_custom_call.1} parent=1 // pred_check
      _
    $region47: #{tpu_custom_call.1} parent=1 // pred_check_branch
      %773 = sbr.rel (0) target = $region49
    $region48: #{tpu_custom_call.1} parent=1 // pred_region
      %s775 = ssub.s32 256, 256
      %776 = vsyncadd [#allocation3], %s775
      %s778 = sshll.u32 [#allocation2], 4
      %s779 = int_to_ptr.vmem [resolvable:$true] %s778
      %781 = dma.vmem_to_hbm [thread:$0]  %s779, 256, %s11, [#allocation3]
    $region49: #{tpu_custom_call.1} parent=1 // pred_fallthru
      _
    // Predicated region
    $region50: #{tpu_custom_call.1} parent=1 // pred_check
      _
    $region51: #{tpu_custom_call.1} parent=1 // pred_check_branch
      %783 = sbr.rel (0) target = $region53
    $region52: #{tpu_custom_call.1} parent=1 // pred_region
      %784 = dma.done [#allocation3], 256
    $region53: #{tpu_custom_call.1} parent=1 // pred_fallthru
      _
    %785 = vsyncpa [#allocation3], 1

</llo_original>
